<compile_context>
chip_gen: v7x
topology: tpu7x:2x2x1
jax: 0.10.0
libtpu: 0.0.40
codegen_flags: <defaults>
</compile_context>

<pallas_src>
import jax
import jax.numpy as jnp
from jax import lax
from jax.experimental import pallas as pl
from jax.experimental.pallas import tpu as pltpu


def qnetwork_kernel(emb_ref, act_ref, w1e_ref, w1a_ref, b1_ref, w2_ref, b2_ref,
                    out_ref):
    # fc1: two MXU pushes summed into one f32 accumulator -- no lane-misaligned
    # concat of the 24-wide and 8-wide feature blocks.
    h = jnp.dot(emb_ref[...], w1e_ref[...], preferred_element_type=jnp.float32)
    h = h + jnp.dot(act_ref[...], w1a_ref[...], preferred_element_type=jnp.float32)
    h = jnp.maximum(h + b1_ref[...], 0.0)          # bias + ReLU, f32 on the VPU

    # fc2: contract the hidden axis of h (block_b, H) against w2 as a (1, H)
    # row.  The result is produced directly lane-dense as (1, block_b), so the
    # store is unmasked and no (block_b, 1) -> (1, block_b) relayout is needed.
    y = lax.dot_general(
        w2_ref[...], h,
        dimension_numbers=(((1,), (1,)), ((), ())),
        preferred_element_type=jnp.float32)        # (1, block_b)
    out_ref[...] = (y + b2_ref[0, 0]).astype(out_ref.dtype)


def qnetwork_forward(embedding, action, w1, b1, w2, b2, *, block_b=1024):
    """embedding: (B, latent+num_traj), action: (B, action_size) -> (B, 1).

    w1: (in_dim, hidden), b1: (1, hidden), w2: (hidden, 1), b2: (1, 1)
    (nn.Linear weights stored transposed, as in the original kernel).
    """
    B, emb_dim = embedding.shape
    _, act_dim = action.shape
    in_dim, hidden = w1.shape
    assert in_dim == emb_dim + act_dim, (in_dim, emb_dim, act_dim)

    # fc1 weights pre-split so the kernel never concatenates along lanes.
    w1_emb = w1[:emb_dim, :]                      # (emb_dim, hidden)
    w1_act = w1[emb_dim:, :]                      # (act_dim, hidden)
    b1_row = b1.reshape(1, hidden)
    w2_row = w2.reshape(1, hidden)                # fc2 weight as a lane-dense row
    b2_s = b2.reshape(1, 1)                       # scalar bias -> SMEM

    # Row tile: one full tile (rounded up to the 8-sublane granule) for small
    # batches, otherwise a 128-multiple so the lane-dense (1, block) output
    # stores stay unmasked.  block_b=1024 keeps the double-buffered f32 input
    # tiles at ~2 MiB -- far inside v7x's 32 MiB scoped-VMEM default (64 MiB
    # physical), let alone v5e/v6e's 128 MiB; raise block_b (and
    # vmem_limit_bytes) only for very large batches.
    if B <= block_b:
        bb = max(8, ((B + 7) // 8) * 8)
    else:
        assert block_b % 128 == 0, "row tile must be a multiple of 128 when tiled"
        bb = block_b
    b_pad = ((B + bb - 1) // bb) * bb
    if b_pad != B:
        embedding = jnp.pad(embedding, ((0, b_pad - B), (0, 0)))
        action = jnp.pad(action, ((0, b_pad - B), (0, 0)))

    grid = (b_pad // bb,)
    out = pl.pallas_call(
        qnetwork_kernel,
        out_shape=jax.ShapeDtypeStruct((1, b_pad), jnp.float32),
        grid=grid,
        in_specs=[
            pl.BlockSpec((bb, emb_dim), lambda i: (i, 0)),       # streams
            pl.BlockSpec((bb, act_dim), lambda i: (i, 0)),       # streams
            pl.BlockSpec((emb_dim, hidden), lambda i: (0, 0)),   # resident
            pl.BlockSpec((act_dim, hidden), lambda i: (0, 0)),   # resident
            pl.BlockSpec((1, hidden), lambda i: (0, 0)),         # resident
            pl.BlockSpec((1, hidden), lambda i: (0, 0)),         # resident
            pl.BlockSpec(memory_space=pltpu.MemorySpace.SMEM),   # b2 scalar
        ],
        out_specs=pl.BlockSpec((1, bb), lambda i: (0, i)),        # lane-dense
        compiler_params=pltpu.CompilerParams(
            dimension_semantics=("parallel",)),
    )(embedding, action, w1_emb, w1_act, b1_row, w2_row, b2_s)

    return out[0, :B].reshape(B, 1)


def reference_forward(embedding, action, w1, b1, w2, b2):
    x = jnp.concatenate([embedding, action], axis=-1)
    h = jnp.maximum(x @ w1 + b1, 0.0)
    return h @ w2 + b2


if __name__ == "__main__":
    # Module hyperparameters (small, consistent with the __init__ signature).
    latent_size = 16
    num_sample_trajectories = 8
    action_size = 8
    hidden_size = 32
    batch = 8

    in_dim = latent_size + num_sample_trajectories + action_size  # fc1 input

    key = jax.random.PRNGKey(0)
    k_emb, k_act, k_w1, k_b1, k_w2, k_b2, k_e2, k_a2 = jax.random.split(key, 8)

    # Deterministic synthetic parameters (nn.Linear shapes, stored transposed).
    w1 = jax.random.normal(k_w1, (in_dim, hidden_size), jnp.float32) * 0.1
    b1 = jax.random.normal(k_b1, (1, hidden_size), jnp.float32) * 0.1
    w2 = jax.random.normal(k_w2, (hidden_size, 1), jnp.float32) * 0.1
    b2 = jax.random.normal(k_b2, (1, 1), jnp.float32) * 0.1

    # Small-batch check (single tile).
    embedding = jax.random.normal(
        k_emb, (batch, latent_size + num_sample_trajectories), jnp.float32)
    action = jax.random.normal(k_act, (batch, action_size), jnp.float32)

    out = jax.block_until_ready(
        qnetwork_forward(embedding, action, w1, b1, w2, b2))
    ref = reference_forward(embedding, action, w1, b1, w2, b2)
    assert out.shape == (batch, 1), out.shape
    assert jnp.allclose(out, ref, atol=1e-5, rtol=1e-5), (out, ref)

    # Batched/tiled path check: grid > 1, padded batch, weights resident
    # across grid steps, lane-dense output blocks of 128.
    big_batch = 300
    emb2 = jax.random.normal(
        k_e2, (big_batch, latent_size + num_sample_trajectories), jnp.float32)
    act2 = jax.random.normal(k_a2, (big_batch, action_size), jnp.float32)
    out2 = jax.block_until_ready(
        qnetwork_forward(emb2, act2, w1, b1, w2, b2, block_b=128))
    ref2 = reference_forward(emb2, act2, w1, b1, w2, b2)
    assert out2.shape == (big_batch, 1), out2.shape
    assert jnp.allclose(out2, ref2, atol=1e-5, rtol=1e-5), (out2, ref2)

    print("KERNEL_OK")
</pallas_src>

<mosaic_0001>
module attributes {stable_mosaic.version = 11 : i64} {
  func.func @qnetwork_kernel(%arg0: i32, %arg1: memref<8x24xf32, #tpu.memory_space<vmem>>, %arg2: memref<8x8xf32, #tpu.memory_space<vmem>>, %arg3: memref<24x32xf32, #tpu.memory_space<vmem>>, %arg4: memref<8x32xf32, #tpu.memory_space<vmem>>, %arg5: memref<1x32xf32, #tpu.memory_space<vmem>>, %arg6: memref<1x32xf32, #tpu.memory_space<vmem>>, %arg7: memref<1x1xf32, #tpu.memory_space<smem>>, %arg8: memref<1x8xf32, #tpu.memory_space<vmem>>) attributes {dimension_semantics = [#tpu.dimension_semantics<parallel>], iteration_bounds = array<i64: 1>, scalar_prefetch = 0 : i64, scratch_operands = 0 : i64, tpu.core_type = #tpu.core_type<tc>, window_params = [{transform_indices = @transform_0, window_bounds = array<i64: 8, 24>}, {transform_indices = @transform_1, window_bounds = array<i64: 8, 8>}, {pipeline_mode = #tpu.pipeline_mode<synchronous>, transform_indices = @transform_2, window_bounds = array<i64: 24, 32>}, {pipeline_mode = #tpu.pipeline_mode<synchronous>, transform_indices = @transform_3, window_bounds = array<i64: 8, 32>}, {pipeline_mode = #tpu.pipeline_mode<synchronous>, transform_indices = @transform_4, window_bounds = array<i64: 1, 32>}, {pipeline_mode = #tpu.pipeline_mode<synchronous>, transform_indices = @transform_5, window_bounds = array<i64: 1, 32>}, {transform_indices = @transform_6, window_bounds = array<i64: 1, 1>}, {transform_indices = @transform_7, window_bounds = array<i64: 1, 8>}]} {
    %c0 = arith.constant 0 : index
    %c0_0 = arith.constant 0 : index
    %0 = vector.load %arg1[%c0, %c0_0] : memref<8x24xf32, #tpu.memory_space<vmem>>, vector<8x24xf32>
    %c0_1 = arith.constant 0 : index
    %c0_2 = arith.constant 0 : index
    %1 = vector.load %arg3[%c0_1, %c0_2] : memref<24x32xf32, #tpu.memory_space<vmem>>, vector<24x32xf32>
    %cst = arith.constant dense<0.000000e+00> : vector<8x32xf32>
    %2 = tpu.matmul %0, %1, %cst {dimension_numbers = #tpu.dot_dimension_numbers<[1], [0], [0], [1], [0, 0, 1, 1], [], []>} : vector<8x24xf32>, vector<24x32xf32>, vector<8x32xf32> -> vector<8x32xf32>
    %c0_3 = arith.constant 0 : index
    %c0_4 = arith.constant 0 : index
    %3 = vector.load %arg2[%c0_3, %c0_4] : memref<8x8xf32, #tpu.memory_space<vmem>>, vector<8x8xf32>
    %c0_5 = arith.constant 0 : index
    %c0_6 = arith.constant 0 : index
    %4 = vector.load %arg4[%c0_5, %c0_6] : memref<8x32xf32, #tpu.memory_space<vmem>>, vector<8x32xf32>
    %cst_7 = arith.constant dense<0.000000e+00> : vector<8x32xf32>
    %5 = tpu.matmul %3, %4, %cst_7 {dimension_numbers = #tpu.dot_dimension_numbers<[1], [0], [0], [1], [0, 0, 1, 1], [], []>} : vector<8x8xf32>, vector<8x32xf32>, vector<8x32xf32> -> vector<8x32xf32>
    %6 = arith.addf %2, %5 : vector<8x32xf32>
    %c0_8 = arith.constant 0 : index
    %c0_9 = arith.constant 0 : index
    %7 = vector.load %arg5[%c0_8, %c0_9] : memref<1x32xf32, #tpu.memory_space<vmem>>, vector<1x32xf32>
    %8 = vector.broadcast %7 : vector<1x32xf32> to vector<8x32xf32>
    %9 = arith.addf %6, %8 : vector<8x32xf32>
    %cst_10 = arith.constant 0.000000e+00 : f32
    %10 = vector.broadcast %cst_10 : f32 to vector<8x32xf32>
    %11 = arith.maximumf %9, %10 : vector<8x32xf32>
    %c0_11 = arith.constant 0 : index
    %c0_12 = arith.constant 0 : index
    %12 = vector.load %arg6[%c0_11, %c0_12] : memref<1x32xf32, #tpu.memory_space<vmem>>, vector<1x32xf32>
    %cst_13 = arith.constant dense<0.000000e+00> : vector<1x8xf32>
    %13 = tpu.matmul %12, %11, %cst_13 {dimension_numbers = #tpu.dot_dimension_numbers<[1], [1], [0], [0], [0, 0, 1, 0], [], []>} : vector<1x32xf32>, vector<8x32xf32>, vector<1x8xf32> -> vector<1x8xf32>
    %c0_14 = arith.constant 0 : index
    %c0_15 = arith.constant 0 : index
    %14 = memref.load %arg7[%c0_14, %c0_15] : memref<1x1xf32, #tpu.memory_space<smem>>
    %15 = vector.broadcast %14 : f32 to vector<1x8xf32>
    %16 = arith.addf %13, %15 : vector<1x8xf32>
    %c0_16 = arith.constant 0 : index
    %c0_17 = arith.constant 0 : index
    %17 = vector.load %arg8[%c0_16, %c0_17] : memref<1x8xf32, #tpu.memory_space<vmem>>, vector<1x8xf32>
    tpu.vector_store %arg8[%c0_16, %c0_17], %16 {strides = array<i32>} : memref<1x8xf32, #tpu.memory_space<vmem>>, vector<1x8xf32>,
    return
  }
  func.func @transform_0(%arg0: i32) -> (i32, i32) {
    %c0_i32 = arith.constant 0 : i32
    %c0_i32_0 = arith.constant 0 : i32
    return %arg0, %c0_i32 : i32, i32
  }
  func.func @transform_1(%arg0: i32) -> (i32, i32) {
    %c0_i32 = arith.constant 0 : i32
    %c0_i32_0 = arith.constant 0 : i32
    return %arg0, %c0_i32 : i32, i32
  }
  func.func @transform_2(%arg0: i32) -> (i32, i32) {
    %c0_i32 = arith.constant 0 : i32
    %c0_i32_0 = arith.constant 0 : i32
    %c0_i32_1 = arith.constant 0 : i32
    return %c0_i32, %c0_i32_0 : i32, i32
  }
  func.func @transform_3(%arg0: i32) -> (i32, i32) {
    %c0_i32 = arith.constant 0 : i32
    %c0_i32_0 = arith.constant 0 : i32
    %c0_i32_1 = arith.constant 0 : i32
    return %c0_i32, %c0_i32_0 : i32, i32
  }
  func.func @transform_4(%arg0: i32) -> (i32, i32) {
    %c0_i32 = arith.constant 0 : i32
    %c0_i32_0 = arith.constant 0 : i32
    %c0_i32_1 = arith.constant 0 : i32
    return %c0_i32, %c0_i32_0 : i32, i32
  }
  func.func @transform_5(%arg0: i32) -> (i32, i32) {
    %c0_i32 = arith.constant 0 : i32
    %c0_i32_0 = arith.constant 0 : i32
    %c0_i32_1 = arith.constant 0 : i32
    return %c0_i32, %c0_i32_0 : i32, i32
  }
  func.func @transform_6(%arg0: i32) -> (i32, i32) {
    %c0_i32 = arith.constant 0 : i32
    %c0_i32_0 = arith.constant 0 : i32
    %c0_i32_1 = arith.constant 0 : i32
    return %c0_i32, %c0_i32_0 : i32, i32
  }
  func.func @transform_7(%arg0: i32) -> (i32, i32) {
    %c0_i32 = arith.constant 0 : i32
    %c0_i32_0 = arith.constant 0 : i32
    return %c0_i32, %arg0 : i32, i32
  }
}

</mosaic_0001>

<llo_original>
// kernel: tpu_custom_call.1
$region0: #{tpu_custom_call.1}
  #allocation0 [shape = 'u32[]', space=smem, size = 0x4, offset = 0x4, fixed_abs, tag = 'smem constant byte address 0x4 - core index']
  #allocation1 [shape = 'u32[144,128]{1,0:T(1,128)}', space=vmem, size = 0x12000, scoped, tag = 'internal scratch']
  #allocation2 [shape = 'f32[1,1]{1,0:T(1,128)S(6)}', space=smem, size = 0x200, scoped, tag = 'scoped memory for tpu_custom_call.1']
  %s0 = inlined_call_operand.hbm [shape: f32[8,24], index: 0, kind: input, shape index: {}]
  %s1 = inlined_call_operand.hbm [shape: f32[8,8], index: 1, kind: input, shape index: {}]
  %s2 = inlined_call_operand.hbm [shape: f32[24,32], index: 2, kind: input, shape index: {}]
  %s3 = inlined_call_operand.vmem [shape: f32[8,32], index: 3, kind: input, shape index: {}]
  %s4 = inlined_call_operand.vmem [shape: f32[1,32], index: 4, kind: input, shape index: {}]
  %s5 = inlined_call_operand.vmem [shape: f32[1,32], index: 5, kind: input, shape index: {}]
  %s6 = inlined_call_operand.<no memory space> [shape: f32[1,1], index: 6, kind: input, shape index: {}]
  %s7 = inlined_call_operand.hbm [shape: f32[1,8], index: 7, kind: output, shape index: {}]
  %s8 = sld [smem:[#allocation0]]
  $region50: #{tpu_custom_call.1} parent=0
    _
  %s10 = ssub.s32 1, %s8
  %s11 = scalar_select 0, %s10, %s8
  %12 = sst [smem:[#allocation2]] %s6
  $region1: #{tpu_custom_call.1} parent=0
    #allocation3 [shape = 'u8[4096]{0}', space=vmem, size = 0x1000, scoped, tag = 'input window, operand 0, single buffered']
    #allocation4 [shape = 's32[1]{0}', space=sflag, size = 0x4, scoped, tag = 'scoped memory for tpu_custom_call.1']
    #allocation5 [shape = 's32[1]{0}', space=sflag, size = 0x4, scoped, tag = 'scoped memory for tpu_custom_call.1']
    #allocation6 [shape = 'u8[4096]{0}', space=vmem, size = 0x1000, scoped, tag = 'input window, operand 1, single buffered']
    #allocation7 [shape = 's32[1]{0}', space=sflag, size = 0x4, scoped, tag = 'scoped memory for tpu_custom_call.1']
    #allocation8 [shape = 'u8[12288]{0}', space=vmem, size = 0x3000, scoped, tag = 'input window, operand 2, single buffered']
    #allocation9 [shape = 'u8[512]{0}', space=vmem, size = 0x400, scoped, tag = 'output window, operand 0, single buffered']
    %13 = vsyncpa [#allocation4], 0
    %14 = vsyncpa [#allocation7], 0
    %15 = vsyncpa [#allocation5], 0
    // Predicated region
    $region2: #{tpu_custom_call.1} parent=1 // pred_check
      _
    $region3: #{tpu_custom_call.1} parent=1 // pred_check_branch
      %17 = sbr.rel (0) target = $region5
    $region4: #{tpu_custom_call.1} parent=1 // pred_region
      %s19 = ssub.s32 128, 128
      %20 = vsyncadd [#allocation4], %s19
      %s22 = sshll.u32 [#allocation3], 4
      %s23 = int_to_ptr.vmem [resolvable:$true] %s22
      %25 = dma.hbm_to_vmem [thread:$0]  %s0, 128, %s23, [#allocation4]
    $region5: #{tpu_custom_call.1} parent=1 // pred_fallthru
      _
    // Predicated region
    $region6: #{tpu_custom_call.1} parent=1 // pred_check
      _
    $region7: #{tpu_custom_call.1} parent=1 // pred_check_branch
      %27 = sbr.rel (0) target = $region9
    $region8: #{tpu_custom_call.1} parent=1 // pred_region
      %s29 = ssub.s32 128, 128
      %30 = vsyncadd [#allocation7], %s29
      %s32 = sshll.u32 [#allocation6], 4
      %s33 = int_to_ptr.vmem [resolvable:$true] %s32
      %35 = dma.hbm_to_vmem [thread:$0]  %s1, 128, %s33, [#allocation7]
    $region9: #{tpu_custom_call.1} parent=1 // pred_fallthru
      _
    // Predicated region
    $region10: #{tpu_custom_call.1} parent=1 // pred_check
      _
    $region11: #{tpu_custom_call.1} parent=1 // pred_check_branch
      %37 = sbr.rel (0) target = $region13
    $region12: #{tpu_custom_call.1} parent=1 // pred_region
      %s39 = ssub.s32 384, 384
      %40 = vsyncadd [#allocation7], %s39
      %s41 = sshll.u32 [#allocation8], 4
      %s42 = int_to_ptr.vmem [resolvable:$true] %s41
      %47 = dma.hbm_to_vmem [thread:$0]  %s2, 384, %s42, [#allocation7], 128, 128, 8
    $region13: #{tpu_custom_call.1} parent=1 // pred_fallthru
      _
    // Predicated region
    $region14: #{tpu_custom_call.1} parent=1 // pred_check
      _
    $region15: #{tpu_custom_call.1} parent=1 // pred_check_branch
      %49 = sbr.rel (0) target = $region17
    $region16: #{tpu_custom_call.1} parent=1 // pred_region
      _
    $region17: #{tpu_custom_call.1} parent=1 // pred_fallthru
      _
    // Predicated region
    $region18: #{tpu_custom_call.1} parent=1 // pred_check
      _
    $region19: #{tpu_custom_call.1} parent=1 // pred_check_branch
      %51 = sbr.rel (0) target = $region21
    $region20: #{tpu_custom_call.1} parent=1 // pred_region
      _
    $region21: #{tpu_custom_call.1} parent=1 // pred_fallthru
      _
    // Predicated region
    $region22: #{tpu_custom_call.1} parent=1 // pred_check
      _
    $region23: #{tpu_custom_call.1} parent=1 // pred_check_branch
      %53 = sbr.rel (0) target = $region25
    $region24: #{tpu_custom_call.1} parent=1 // pred_region
      _
    $region25: #{tpu_custom_call.1} parent=1 // pred_fallthru
      _
    // Predicated region
    $region26: #{tpu_custom_call.1} parent=1 // pred_check
      _
    $region27: #{tpu_custom_call.1} parent=1 // pred_check_branch
      %55 = sbr.rel (0) target = $region29
    $region28: #{tpu_custom_call.1} parent=1 // pred_region
      _
    $region29: #{tpu_custom_call.1} parent=1 // pred_fallthru
      _
    // Predicated region
    $region30: #{tpu_custom_call.1} parent=1 // pred_check
      _
    $region31: #{tpu_custom_call.1} parent=1 // pred_check_branch
      %57 = sbr.rel (0) target = $region33
    $region32: #{tpu_custom_call.1} parent=1 // pred_region
      %58 = dma.done [#allocation4], 128
    $region33: #{tpu_custom_call.1} parent=1 // pred_fallthru
      _
    // Predicated region
    $region34: #{tpu_custom_call.1} parent=1 // pred_check
      _
    $region35: #{tpu_custom_call.1} parent=1 // pred_check_branch
      %60 = sbr.rel (0) target = $region37
    $region36: #{tpu_custom_call.1} parent=1 // pred_region
      %61 = dma.done [#allocation7], 128
    $region37: #{tpu_custom_call.1} parent=1 // pred_fallthru
      _
    // Predicated region
    $region38: #{tpu_custom_call.1} parent=1 // pred_check
      _
    $region39: #{tpu_custom_call.1} parent=1 // pred_check_branch
      %63 = sbr.rel (0) target = $region41
    $region40: #{tpu_custom_call.1} parent=1 // pred_region
      %64 = dma.done [#allocation7], 384
    $region41: #{tpu_custom_call.1} parent=1 // pred_fallthru
      _
    %v65 = vld [vmem:[#allocation3] sm:$0xff]
    %v66 = vld [vmem:[#allocation8] sm:$0xff]
    %v67 = vld [vmem:[#allocation8 + $0x8] sm:$0xff]
    %v68 = vld [vmem:[#allocation8 + $0x10] sm:$0xff]
    %v69 = vld [vmem:[#allocation6] sm:$0xff]
    %v70 = vld [vmem:[%s3] sm:$0xff]
    %vm71 = vcmask 64512
    %v73 = vsel %vm71, %v69, 0
    %75 = vmatprep.subr.mxu0 0.0
    %76 = vmatpush1.msra.mxu0 %v70
    %77 = vmatprep.subr.mxu0 0.0
    %78 = vmatpush1.msra.mxu0 0.0
    %79 = vmatprep.subr.mxu0 0.0
    %80 = vmatpush1.msra.mxu0 0.0
    %81 = vmatprep.subr.mxu0 0.0
    %82 = vmatpush1.msra.mxu0 0.0
    %83 = vmatprep.subr.mxu0 0.0
    %84 = vmatpush1.msra.mxu0 0.0
    %85 = vmatprep.subr.mxu0 0.0
    %86 = vmatpush1.msra.mxu0 0.0
    %87 = vmatprep.subr.mxu0 0.0
    %88 = vmatpush1.msra.mxu0 0.0
    %89 = vmatprep.subr.mxu0 0.0
    %90 = vmatpush1.msra.mxu0 0.0
    %91 = vmatprep.subr.mxu0 0.0
    %92 = vmatpush1.msra.mxu0 0.0
    %93 = vmatprep.subr.mxu0 0.0
    %94 = vmatpush1.msra.mxu0 0.0
    %95 = vmatprep.subr.mxu0 0.0
    %96 = vmatpush1.msra.mxu0 0.0
    %97 = vmatprep.subr.mxu0 0.0
    %98 = vmatpush1.msra.mxu0 0.0
    %99 = vmatprep.subr.mxu0 0.0
    %100 = vmatpush1.msra.mxu0 0.0
    %101 = vmatprep.subr.mxu0 0.0
    %102 = vmatpush1.msra.mxu0 0.0
    %103 = vmatprep.subr.mxu0 0.0
    %104 = vmatpush1.msra.mxu0 0.0
    %105 = vmatprep.subr.mxu0 0.0
    %106 = vmatpush1.msra.mxu0 0.0
    %107 = vmatprep.subr.mxu0 0.0
    %108 = vmatpush1.msra.mxu0 0.0
    %109 = vmatprep.subr.mxu0 0.0
    %110 = vmatpush1.msra.mxu0 0.0
    %111 = vmatprep.subr.mxu0 0.0
    %112 = vmatpush1.msra.mxu0 0.0
    %113 = vmatprep.subr.mxu0 0.0
    %114 = vmatpush1.msra.mxu0 0.0
    %115 = vmatprep.subr.mxu0 0.0
    %116 = vmatpush1.msra.mxu0 0.0
    %117 = vmatprep.subr.mxu0 0.0
    %118 = vmatpush1.msra.mxu0 0.0
    %119 = vmatprep.subr.mxu0 0.0
    %120 = vmatpush1.msra.mxu0 0.0
    %121 = vmatprep.subr.mxu0 0.0
    %122 = vmatpush1.msra.mxu0 0.0
    %123 = vmatprep.subr.mxu0 0.0
    %124 = vmatpush1.msra.mxu0 0.0
    %125 = vmatprep.subr.mxu0 0.0
    %126 = vmatpush1.msra.mxu0 0.0
    %127 = vmatprep.subr.mxu0 0.0
    %128 = vmatpush1.msra.mxu0 0.0
    %129 = vmatprep.subr.mxu0 0.0
    %130 = vmatpush1.msra.mxu0 0.0
    %131 = vmatprep.subr.mxu0 0.0
    %132 = vmatpush1.msra.mxu0 0.0
    %133 = vmatprep.subr.mxu0 0.0
    %134 = vmatpush1.msra.mxu0 0.0
    %135 = vmatprep.subr.mxu0 0.0
    %136 = vmatpush1.msra.mxu0 0.0
    %137 = vmatprep.subr.mxu0 0.0
    %138 = vmatpush1.msra.mxu0 0.0
    %139 = vmatprep.mubr.f32.mxu0 0.0
    %140 = vmatmul.mubr.f32.gmra.mrb[0].mxu0 %v73
    %v141 = vpop.f32.mrb[0].mxu0
    %v142 = vadd.f32 0.0, %v141
    %v143 = vpop.f32.mrb[0].mxu0
    %144 = vdwg.mxu0
    %vm145 = vcmask 195584
    %v147 = vsel %vm145, %v65, 0
    %149 = vmatprep.subr.mxu0 0.0
    %150 = vmatpush1.msra.mxu0 %v66
    %151 = vmatprep.subr.mxu0 0.0
    %152 = vmatpush1.msra.mxu0 %v67
    %153 = vmatprep.subr.mxu0 0.0
    %154 = vmatpush1.msra.mxu0 %v68
    %155 = vmatprep.subr.mxu0 0.0
    %156 = vmatpush1.msra.mxu0 0.0
    %157 = vmatprep.subr.mxu0 0.0
    %158 = vmatpush1.msra.mxu0 0.0
    %159 = vmatprep.subr.mxu0 0.0
    %160 = vmatpush1.msra.mxu0 0.0
    %161 = vmatprep.subr.mxu0 0.0
    %162 = vmatpush1.msra.mxu0 0.0
    %163 = vmatprep.subr.mxu0 0.0
    %164 = vmatpush1.msra.mxu0 0.0
    %165 = vmatprep.subr.mxu0 0.0
    %166 = vmatpush1.msra.mxu0 0.0
    %167 = vmatprep.subr.mxu0 0.0
    %168 = vmatpush1.msra.mxu0 0.0
    %169 = vmatprep.subr.mxu0 0.0
    %170 = vmatpush1.msra.mxu0 0.0
    %171 = vmatprep.subr.mxu0 0.0
    %172 = vmatpush1.msra.mxu0 0.0
    %173 = vmatprep.subr.mxu0 0.0
    %174 = vmatpush1.msra.mxu0 0.0
    %175 = vmatprep.subr.mxu0 0.0
    %176 = vmatpush1.msra.mxu0 0.0
    %177 = vmatprep.subr.mxu0 0.0
    %178 = vmatpush1.msra.mxu0 0.0
    %179 = vmatprep.subr.mxu0 0.0
    %180 = vmatpush1.msra.mxu0 0.0
    %181 = vmatprep.subr.mxu0 0.0
    %182 = vmatpush1.msra.mxu0 0.0
    %183 = vmatprep.subr.mxu0 0.0
    %184 = vmatpush1.msra.mxu0 0.0
    %185 = vmatprep.subr.mxu0 0.0
    %186 = vmatpush1.msra.mxu0 0.0
    %187 = vmatprep.subr.mxu0 0.0
    %188 = vmatpush1.msra.mxu0 0.0
    %189 = vmatprep.subr.mxu0 0.0
    %190 = vmatpush1.msra.mxu0 0.0
    %191 = vmatprep.subr.mxu0 0.0
    %192 = vmatpush1.msra.mxu0 0.0
    %193 = vmatprep.subr.mxu0 0.0
    %194 = vmatpush1.msra.mxu0 0.0
    %195 = vmatprep.subr.mxu0 0.0
    %196 = vmatpush1.msra.mxu0 0.0
    %197 = vmatprep.subr.mxu0 0.0
    %198 = vmatpush1.msra.mxu0 0.0
    %199 = vmatprep.subr.mxu0 0.0
    %200 = vmatpush1.msra.mxu0 0.0
    %201 = vmatprep.subr.mxu0 0.0
    %202 = vmatpush1.msra.mxu0 0.0
    %203 = vmatprep.subr.mxu0 0.0
    %204 = vmatpush1.msra.mxu0 0.0
    %205 = vmatprep.subr.mxu0 0.0
    %206 = vmatpush1.msra.mxu0 0.0
    %207 = vmatprep.subr.mxu0 0.0
    %208 = vmatpush1.msra.mxu0 0.0
    %209 = vmatprep.subr.mxu0 0.0
    %210 = vmatpush1.msra.mxu0 0.0
    %211 = vmatprep.subr.mxu0 0.0
    %212 = vmatpush1.msra.mxu0 0.0
    %213 = vmatprep.mubr.f32.mxu0 0.0
    %214 = vmatmul.mubr.f32.gmra.mrb[0].mxu0 %v147
    %v215 = vpop.f32.mrb[0].mxu0
    %v216 = vadd.f32 %v142, %v215
    %v217 = vpop.f32.mrb[0].mxu0
    %218 = vdwg.mxu0
    %v219 = vld [vmem:[%s4] sm:$0x1]
    %v221 = vlaneseq
    %v222 = vshrl.u32 %v221, 7
    %v223 = vsub.s32 0, %v222
    %v224 = vrot.slane %v219, %v223
    %v226 = vadd.f32 %v216, %v224
    %v227 = vmax.f32 %v226, 0.0
    %v228 = vld [vmem:[%s5] sm:$0x1]
    %s229 = sld [smem:[#allocation2]]
    %v230 = vstv %s229
    %vm231 = vcmask 261120
    %v233 = vsel %vm231, %v228, 0
    %v236 = vsel %vm231, %v227, 0
    %238 = vmatprep.subr.mxu0 0.0
    %239 = vmatpush1.xpose.msra.mxu0 %v236
    %240 = vmatprep.subr.mxu0 0.0
    %241 = vmatpush1.xpose.msra.mxu0 0.0
    %242 = vmatprep.subr.mxu0 0.0
    %243 = vmatpush1.xpose.msra.mxu0 0.0
    %244 = vmatprep.subr.mxu0 0.0
    %245 = vmatpush1.xpose.msra.mxu0 0.0
    %246 = vmatprep.subr.mxu0 0.0
    %247 = vmatpush1.xpose.msra.mxu0 0.0
    %248 = vmatprep.subr.mxu0 0.0
    %249 = vmatpush1.xpose.msra.mxu0 0.0
    %250 = vmatprep.subr.mxu0 0.0
    %251 = vmatpush1.xpose.msra.mxu0 0.0
    %252 = vmatprep.subr.mxu0 0.0
    %253 = vmatpush1.xpose.msra.mxu0 0.0
    %254 = vmatprep.subr.mxu0 0.0
    %255 = vmatpush1.xpose.msra.mxu0 0.0
    %256 = vmatprep.subr.mxu0 0.0
    %257 = vmatpush1.xpose.msra.mxu0 0.0
    %258 = vmatprep.subr.mxu0 0.0
    %259 = vmatpush1.xpose.msra.mxu0 0.0
    %260 = vmatprep.subr.mxu0 0.0
    %261 = vmatpush1.xpose.msra.mxu0 0.0
    %262 = vmatprep.subr.mxu0 0.0
    %263 = vmatpush1.xpose.msra.mxu0 0.0
    %264 = vmatprep.subr.mxu0 0.0
    %265 = vmatpush1.xpose.msra.mxu0 0.0
    %266 = vmatprep.subr.mxu0 0.0
    %267 = vmatpush1.xpose.msra.mxu0 0.0
    %268 = vmatprep.subr.mxu0 0.0
    %269 = vmatpush1.xpose.msra.mxu0 0.0
    %270 = vmatprep.subr.mxu0 0.0
    %271 = vmatpush1.xpose.msra.mxu0 0.0
    %272 = vmatprep.subr.mxu0 0.0
    %273 = vmatpush1.xpose.msra.mxu0 0.0
    %274 = vmatprep.subr.mxu0 0.0
    %275 = vmatpush1.xpose.msra.mxu0 0.0
    %276 = vmatprep.subr.mxu0 0.0
    %277 = vmatpush1.xpose.msra.mxu0 0.0
    %278 = vmatprep.subr.mxu0 0.0
    %279 = vmatpush1.xpose.msra.mxu0 0.0
    %280 = vmatprep.subr.mxu0 0.0
    %281 = vmatpush1.xpose.msra.mxu0 0.0
    %282 = vmatprep.subr.mxu0 0.0
    %283 = vmatpush1.xpose.msra.mxu0 0.0
    %284 = vmatprep.subr.mxu0 0.0
    %285 = vmatpush1.xpose.msra.mxu0 0.0
    %286 = vmatprep.subr.mxu0 0.0
    %287 = vmatpush1.xpose.msra.mxu0 0.0
    %288 = vmatprep.subr.mxu0 0.0
    %289 = vmatpush1.xpose.msra.mxu0 0.0
    %290 = vmatprep.subr.mxu0 0.0
    %291 = vmatpush1.xpose.msra.mxu0 0.0
    %292 = vmatprep.subr.mxu0 0.0
    %293 = vmatpush1.xpose.msra.mxu0 0.0
    %294 = vmatprep.subr.mxu0 0.0
    %295 = vmatpush1.xpose.msra.mxu0 0.0
    %296 = vmatprep.subr.mxu0 0.0
    %297 = vmatpush1.xpose.msra.mxu0 0.0
    %298 = vmatprep.subr.mxu0 0.0
    %299 = vmatpush1.xpose.msra.mxu0 0.0
    %300 = vmatprep.subr.mxu0 0.0
    %301 = vmatpush1.xpose.msra.mxu0 0.0
    %302 = vmatprep.mubr.f32.mxu0 0.0
    %303 = vmatmul.mubr.f32.gmra.mrb[0].mxu0 %v233
    %v304 = vpop.f32.mrb[0].mxu0
    %v305 = vadd.f32 %v230, %v304
    %v306 = vpop.f32.mrb[0].mxu0
    %307 = vdwg.mxu0
    %vm308 = vcmask 57344
    %309 = vst.msk [vmem:[#allocation9] sm:$0x1] %vm308, %v305
    // Predicated region
    $region42: #{tpu_custom_call.1} parent=1 // pred_check
      _
    $region43: #{tpu_custom_call.1} parent=1 // pred_check_branch
      %311 = sbr.rel (0) target = $region45
    $region44: #{tpu_custom_call.1} parent=1 // pred_region
      %s313 = ssub.s32 16, 16
      %314 = vsyncadd [#allocation5], %s313
      %s316 = sshll.u32 [#allocation9], 4
      %s317 = int_to_ptr.vmem [resolvable:$true] %s316
      %319 = dma.vmem_to_hbm [thread:$0]  %s317, 16, %s7, [#allocation5]
    $region45: #{tpu_custom_call.1} parent=1 // pred_fallthru
      _
    // Predicated region
    $region46: #{tpu_custom_call.1} parent=1 // pred_check
      _
    $region47: #{tpu_custom_call.1} parent=1 // pred_check_branch
      %321 = sbr.rel (0) target = $region49
    $region48: #{tpu_custom_call.1} parent=1 // pred_region
      %322 = dma.done [#allocation5], 16
    $region49: #{tpu_custom_call.1} parent=1 // pred_fallthru
      _
    %323 = vsyncpa [#allocation4], 1
    %324 = vsyncpa [#allocation7], 1
    %325 = vsyncpa [#allocation5], 1

</llo_original>
